<compile_context>
chip_gen: v7x
topology: tpu7x:2x2x1
jax: 0.10.0
libtpu: 0.0.40
codegen_flags: <defaults>
</compile_context>

<pallas_src>
import functools

import jax
import jax.numpy as jnp
from jax.experimental import pallas as pl
from jax.experimental.pallas import tpu as pltpu


def _distill_kl_kernel(t_ref, ys_ref, yt_ref, loss_ref, tnew_ref, kl_acc, t_sc,
                       *, alpha, batch):
    s = pl.program_id(0)            # stage: 0 -> T=1 pass, 1 -> T=t_upd pass
    b = pl.program_id(1)            # batch tile
    nb = pl.num_programs(1)

    # ---- init (first grid step): load the incoming temperature ----
    @pl.when(jnp.logical_and(s == 0, b == 0))
    def _():
        t_sc[0] = t_ref[0]

    # ---- per-stage accumulator reset (vector accumulator in VMEM) ----
    @pl.when(b == 0)
    def _():
        kl_acc[...] = jnp.zeros_like(kl_acc)

    # Stage 0 runs at temperature 1, stage 1 at the updated temperature.
    inv_t = jnp.where(s == 0, jnp.float32(1.0), 1.0 / t_sc[0])

    ys = ys_ref[...].astype(jnp.float32)
    yt = yt_ref[...].astype(jnp.float32)

    # Centered, temperature-scaled logits (max(x/T) = max(x)/T since T > 0).
    z_s = (ys - jnp.max(ys, axis=1, keepdims=True)) * inv_t
    z_t = (yt - jnp.max(yt, axis=1, keepdims=True)) * inv_t

    # Reuse the un-normalized exponentials for both the LSE and the teacher probs.
    e_s = jnp.exp(z_s)
    e_t = jnp.exp(z_t)

    sum_s = jnp.sum(e_s, axis=1, keepdims=True)                    # [tB, 1]
    sum_t = jnp.sum(e_t, axis=1, keepdims=True)                    # [tB, 1]
    num = jnp.sum(e_t * (z_t - z_s), axis=1, keepdims=True)        # [tB, 1]

    # KL_row = sum_c p_t*(lp_t - lp_s) = num/sum_t + (lse_s - lse_t)   (sum_c p_t = 1)
    kl_acc[...] += num / sum_t + (jnp.log(sum_s) - jnp.log(sum_t))

    # ---- end of stage 0: temperature update (the torch.no_grad() block) ----
    @pl.when(jnp.logical_and(s == 0, b == nb - 1))
    def _():
        kl1 = jnp.sum(kl_acc[...]) / batch            # reduction='batchmean'
        t_old = t_sc[0]
        new_t = t_old * (1.0 + kl1)
        t_sc[0] = alpha * t_old + (1.0 - alpha) * new_t

    # ---- end of stage 1: finalize loss ----
    @pl.when(jnp.logical_and(s == 1, b == nb - 1))
    def _():
        t_upd = t_sc[0]
        kl2 = jnp.sum(kl_acc[...]) / batch            # reduction='batchmean'
        loss_ref[0] = kl2 * t_upd * t_upd
        tnew_ref[0] = t_upd


def _vmem_capacity_bytes():
    try:
        return int(pltpu.get_tpu_info().vmem_capacity_bytes)
    except Exception:
        return 64 * 1024 * 1024          # conservative (v7x-sized) fallback


def _pick_block_b(B, C, in_bytes, vmem_budget):
    """Largest legal batch tile that fits the per-step VMEM cost model."""
    # Per-row cost: 2 inputs x 2 pipeline buffers (input dtype) + ~5 live f32 temps.
    row_bytes = C * (4 * in_bytes + 5 * 4)
    if B * row_bytes <= vmem_budget:
        return B                          # single resident tile -> stage 1 re-uses VMEM
    cand = (vmem_budget // max(row_bytes, 1)) // 8 * 8
    cand = max(min(cand, B), 8)
    # Block second-to-last dim must be a multiple of 8 (or the full extent) and
    # must divide B so no partially-out-of-bounds rows pollute the reductions.
    for bb in range(int(cand), 7, -8):
        if B % bb == 0:
            return bb
    return B                              # fall back to full extent (always legal)


def distill_kl(y_s, y_t, T, *, alpha=0.9, block_b=None):
    """Returns (loss, updated_T). y_s, y_t: [B, C] logits (f32 or bf16); T > 0 scalar."""
    B, C = y_s.shape
    assert y_t.shape == (B, C)

    in_bytes = max(jnp.dtype(y_s.dtype).itemsize, jnp.dtype(y_t.dtype).itemsize)
    vmem_cap = _vmem_capacity_bytes()
    vmem_budget = int(vmem_cap * 0.6)     # headroom for scratch / compiler internals

    if block_b is None:
        block_b = _pick_block_b(B, C, in_bytes, vmem_budget)
    if (B % block_b != 0) or not (block_b == B or block_b % 8 == 0):
        block_b = B
    nb = B // block_b

    # Raise the scoped VMEM limit to cover the chosen tile (with ~30% headroom).
    row_bytes = C * (4 * in_bytes + 5 * 4)
    tile_bytes = block_b * row_bytes + 4 * 1024
    vmem_limit = int(min(vmem_cap, max(int(tile_bytes * 1.3), 32 * 1024 * 1024)))

    t_arr = jnp.asarray(T, jnp.float32).reshape((1,))
    kernel = functools.partial(_distill_kl_kernel, alpha=float(alpha), batch=float(B))

    loss, t_new = pl.pallas_call(
        kernel,
        out_shape=(
            jax.ShapeDtypeStruct((1,), jnp.float32),    # loss
            jax.ShapeDtypeStruct((1,), jnp.float32),    # updated temperature
        ),
        grid=(2, nb),
        in_specs=[
            pl.BlockSpec(memory_space=pltpu.MemorySpace.SMEM),        # T (scalar)
            pl.BlockSpec((block_b, C), lambda s, b: (b, 0)),          # y_s tile
            pl.BlockSpec((block_b, C), lambda s, b: (b, 0)),          # y_t tile
        ],
        out_specs=(
            pl.BlockSpec(memory_space=pltpu.MemorySpace.SMEM),
            pl.BlockSpec(memory_space=pltpu.MemorySpace.SMEM),
        ),
        scratch_shapes=[
            pltpu.VMEM((block_b, 1), jnp.float32),   # per-row KL accumulator
            pltpu.SMEM((1,), jnp.float32),           # temperature carry (old -> updated)
        ],
        compiler_params=pltpu.CompilerParams(
            dimension_semantics=("arbitrary", "arbitrary"),
            vmem_limit_bytes=vmem_limit,
        ),
    )(t_arr, y_s, y_t)
    return loss[0], t_new[0]


def _reference(y_s, y_t, T, alpha=0.9):
    """Pure-JAX reference mirroring the PyTorch module."""
    ys = y_s.astype(jnp.float32)
    yt = y_t.astype(jnp.float32)
    B = ys.shape[0]
    lp_s = jax.nn.log_softmax(ys, axis=1)
    lp_t = jax.nn.log_softmax(yt, axis=1)
    p_t = jnp.exp(lp_t)
    kl1 = jnp.sum(p_t * (lp_t - lp_s)) / B
    new_T = T * (1.0 + kl1)
    T_upd = alpha * T + (1 - alpha) * new_T
    lp_s2 = jax.nn.log_softmax(ys / T_upd, axis=1)
    lp_t2 = jax.nn.log_softmax(yt / T_upd, axis=1)
    p_t2 = jnp.exp(lp_t2)
    kl2 = jnp.sum(p_t2 * (lp_t2 - lp_s2)) / B
    return kl2 * T_upd ** 2, T_upd


if __name__ == "__main__":
    # Deterministic parameter init (module's __init__): T = initial_T, alpha = 0.9.
    initial_T = jnp.float32(4.0)
    alpha = 0.9

    k0, k1, k2, k3 = jax.random.split(jax.random.PRNGKey(0), 4)

    # Case 1: small shapes, single resident tile (nb = 1) — stage 1 reuses VMEM data.
    B, C = 8, 128
    y_s = jax.random.normal(k0, (B, C), dtype=jnp.float32)
    y_t = jax.random.normal(k1, (B, C), dtype=jnp.float32)
    loss, t_new = distill_kl(y_s, y_t, initial_T, alpha=alpha)
    jax.block_until_ready((loss, t_new))
    ref_loss, ref_t = _reference(y_s, y_t, initial_T, alpha)
    assert jnp.allclose(loss, ref_loss, rtol=1e-4, atol=1e-5), (loss, ref_loss)
    assert jnp.allclose(t_new, ref_t, rtol=1e-4, atol=1e-5), (t_new, ref_t)

    # Case 2: force a multi-tile grid (nb = 4) to exercise the accumulation path.
    B2, C2 = 32, 256
    y_s2 = jax.random.normal(k2, (B2, C2), dtype=jnp.float32)
    y_t2 = jax.random.normal(k3, (B2, C2), dtype=jnp.float32)
    loss2, t_new2 = distill_kl(y_s2, y_t2, initial_T, alpha=alpha, block_b=8)
    jax.block_until_ready((loss2, t_new2))
    ref_loss2, ref_t2 = _reference(y_s2, y_t2, initial_T, alpha)
    assert jnp.allclose(loss2, ref_loss2, rtol=1e-4, atol=1e-5), (loss2, ref_loss2)
    assert jnp.allclose(t_new2, ref_t2, rtol=1e-4, atol=1e-5), (t_new2, ref_t2)

    print("KERNEL_OK")
</pallas_src>

<mosaic_0001>
module attributes {stable_mosaic.version = 11 : i64} {
  func.func @_distill_kl_kernel(%arg0: i32, %arg1: i32, %arg2: memref<1xf32, #tpu.memory_space<smem>>, %arg3: memref<8x128xf32, #tpu.memory_space<vmem>>, %arg4: memref<8x128xf32, #tpu.memory_space<vmem>>, %arg5: memref<1xf32, #tpu.memory_space<smem>>, %arg6: memref<1xf32, #tpu.memory_space<smem>>, %arg7: memref<8x1xf32, #tpu.memory_space<vmem>>, %arg8: memref<1xf32, #tpu.memory_space<smem>>) attributes {dimension_semantics = [#tpu.dimension_semantics<arbitrary>, #tpu.dimension_semantics<arbitrary>], iteration_bounds = array<i64: 2, 1>, scalar_prefetch = 0 : i64, scratch_operands = 2 : i64, tpu.core_type = #tpu.core_type<tc>, window_params = [{transform_indices = @transform_0, window_bounds = array<i64: 1>}, {transform_indices = @transform_1, window_bounds = array<i64: 8, 128>}, {transform_indices = @transform_2, window_bounds = array<i64: 8, 128>}, {transform_indices = @transform_3, window_bounds = array<i64: 1>}, {transform_indices = @transform_4, window_bounds = array<i64: 1>}]} {
    %c0_i32 = arith.constant 0 : i32
    %0 = arith.cmpi eq, %arg0, %c0_i32 : i32
    %c0_i32_0 = arith.constant 0 : i32
    %1 = arith.cmpi eq, %arg1, %c0_i32_0 : i32
    %2 = arith.andi %0, %1 : i1
    %3 = arith.extui %2 : i1 to i32
    %c0_i32_1 = arith.constant 0 : i32
    %4 = arith.cmpi ne, %3, %c0_i32_1 : i32
    scf.if %4 {
      %c0_24 = arith.constant 0 : index
      %54 = memref.load %arg2[%c0_24] : memref<1xf32, #tpu.memory_space<smem>>
      %c0_25 = arith.constant 0 : index
      %55 = memref.load %arg8[%c0_25] : memref<1xf32, #tpu.memory_space<smem>>
      memref.store %54, %arg8[%c0_25] : memref<1xf32, #tpu.memory_space<smem>>
    } else {
    }
    %c0_i32_2 = arith.constant 0 : i32
    %5 = arith.cmpi eq, %arg1, %c0_i32_2 : i32
    %6 = arith.extui %5 : i1 to i32
    %c0_i32_3 = arith.constant 0 : i32
    %7 = arith.cmpi ne, %6, %c0_i32_3 : i32
    scf.if %7 {
      %cst_24 = arith.constant 0.000000e+00 : f32
      %54 = vector.broadcast %cst_24 : f32 to vector<8x1xf32>
      %c0_25 = arith.constant 0 : index
      %c0_26 = arith.constant 0 : index
      %55 = vector.load %arg7[%c0_25, %c0_26] : memref<8x1xf32, #tpu.memory_space<vmem>>, vector<8x1xf32>
      tpu.vector_store %arg7[%c0_25, %c0_26], %54 {strides = array<i32>} : memref<8x1xf32, #tpu.memory_space<vmem>>, vector<8x1xf32>,
    } else {
    }
    %c0_i32_4 = arith.constant 0 : i32
    %8 = arith.cmpi eq, %arg0, %c0_i32_4 : i32
    %c0 = arith.constant 0 : index
    %9 = memref.load %arg8[%c0] : memref<1xf32, #tpu.memory_space<smem>>
    %cst = arith.constant 1.000000e+00 : f32
    %10 = arith.divf %cst, %9 : f32
    %cst_5 = arith.constant 1.000000e+00 : f32
    %11 = arith.select %8, %cst_5, %10 : f32
    %c0_6 = arith.constant 0 : index
    %c0_7 = arith.constant 0 : index
    %12 = vector.load %arg3[%c0_6, %c0_7] : memref<8x128xf32, #tpu.memory_space<vmem>>, vector<8x128xf32>
    %c0_8 = arith.constant 0 : index
    %c0_9 = arith.constant 0 : index
    %13 = vector.load %arg4[%c0_8, %c0_9] : memref<8x128xf32, #tpu.memory_space<vmem>>, vector<8x128xf32>
    %cst_10 = arith.constant dense<0xFF800000> : vector<8xf32>
    %14 = vector.multi_reduction <maximumf>, %12, %cst_10 [1] : vector<8x128xf32> to vector<8xf32>
    %15 = vector.shape_cast %14 : vector<8xf32> to vector<8x1xf32>
    %16 = vector.broadcast %15 : vector<8x1xf32> to vector<8x128xf32>
    %17 = arith.subf %12, %16 : vector<8x128xf32>
    %18 = vector.broadcast %11 : f32 to vector<8x128xf32>
    %19 = arith.mulf %17, %18 : vector<8x128xf32>
    %cst_11 = arith.constant dense<0xFF800000> : vector<8xf32>
    %20 = vector.multi_reduction <maximumf>, %13, %cst_11 [1] : vector<8x128xf32> to vector<8xf32>
    %21 = vector.shape_cast %20 : vector<8xf32> to vector<8x1xf32>
    %22 = vector.broadcast %21 : vector<8x1xf32> to vector<8x128xf32>
    %23 = arith.subf %13, %22 : vector<8x128xf32>
    %24 = vector.broadcast %11 : f32 to vector<8x128xf32>
    %25 = arith.mulf %23, %24 : vector<8x128xf32>
    %26 = math.exp %19 : vector<8x128xf32>
    %27 = math.exp %25 : vector<8x128xf32>
    %cst_12 = arith.constant dense<0.000000e+00> : vector<8xf32>
    %28 = vector.multi_reduction <add>, %26, %cst_12 [1] : vector<8x128xf32> to vector<8xf32>
    %29 = vector.shape_cast %28 : vector<8xf32> to vector<8x1xf32>
    %cst_13 = arith.constant dense<0.000000e+00> : vector<8xf32>
    %30 = vector.multi_reduction <add>, %27, %cst_13 [1] : vector<8x128xf32> to vector<8xf32>
    %31 = vector.shape_cast %30 : vector<8xf32> to vector<8x1xf32>
    %32 = arith.subf %25, %19 : vector<8x128xf32>
    %33 = arith.mulf %27, %32 : vector<8x128xf32>
    %cst_14 = arith.constant dense<0.000000e+00> : vector<8xf32>
    %34 = vector.multi_reduction <add>, %33, %cst_14 [1] : vector<8x128xf32> to vector<8xf32>
    %35 = vector.shape_cast %34 : vector<8xf32> to vector<8x1xf32>
    %c0_15 = arith.constant 0 : index
    %c0_16 = arith.constant 0 : index
    %36 = vector.load %arg7[%c0_15, %c0_16] : memref<8x1xf32, #tpu.memory_space<vmem>>, vector<8x1xf32>
    %37 = arith.divf %35, %31 : vector<8x1xf32>
    %38 = math.log %29 : vector<8x1xf32>
    %39 = math.log %31 : vector<8x1xf32>
    %40 = arith.subf %38, %39 : vector<8x1xf32>
    %41 = arith.addf %37, %40 : vector<8x1xf32>
    %42 = arith.addf %36, %41 : vector<8x1xf32>
    %c0_17 = arith.constant 0 : index
    %c0_18 = arith.constant 0 : index
    %43 = vector.load %arg7[%c0_17, %c0_18] : memref<8x1xf32, #tpu.memory_space<vmem>>, vector<8x1xf32>
    tpu.vector_store %arg7[%c0_17, %c0_18], %42 {strides = array<i32>} : memref<8x1xf32, #tpu.memory_space<vmem>>, vector<8x1xf32>,
    %c0_i32_19 = arith.constant 0 : i32
    %44 = arith.cmpi eq, %arg0, %c0_i32_19 : i32
    %c0_i32_20 = arith.constant 0 : i32
    %45 = arith.cmpi eq, %arg1, %c0_i32_20 : i32
    %46 = arith.andi %44, %45 : i1
    %47 = arith.extui %46 : i1 to i32
    %c0_i32_21 = arith.constant 0 : i32
    %48 = arith.cmpi ne, %47, %c0_i32_21 : i32
    scf.if %48 {
      %c0_24 = arith.constant 0 : index
      %c0_25 = arith.constant 0 : index
      %54 = vector.load %arg7[%c0_24, %c0_25] : memref<8x1xf32, #tpu.memory_space<vmem>>, vector<8x1xf32>
      %55 = vector.shape_cast %54 : vector<8x1xf32> to vector<1x8x1xf32>
      %cst_26 = arith.constant dense<0.000000e+00> : vector<1xf32>
      %56 = vector.multi_reduction <add>, %55, %cst_26 [1, 2] : vector<1x8x1xf32> to vector<1xf32>
      %57 = vector.shape_cast %56 : vector<1xf32> to vector<1x1x1xf32>
      %58 = vector.extract %57[0, 0, 0] : f32 from vector<1x1x1xf32>
      %cst_27 = arith.constant 8.000000e+00 : f32
      %59 = arith.divf %58, %cst_27 : f32
      %c0_28 = arith.constant 0 : index
      %60 = memref.load %arg8[%c0_28] : memref<1xf32, #tpu.memory_space<smem>>
      %cst_29 = arith.constant 1.000000e+00 : f32
      %61 = arith.addf %cst_29, %59 : f32
      %62 = arith.mulf %60, %61 : f32
      %cst_30 = arith.constant 0.899999976 : f32
      %63 = arith.mulf %cst_30, %60 : f32
      %cst_31 = arith.constant 1.000000e-01 : f32
      %64 = arith.mulf %cst_31, %62 : f32
      %65 = arith.addf %63, %64 : f32
      %c0_32 = arith.constant 0 : index
      %66 = memref.load %arg8[%c0_32] : memref<1xf32, #tpu.memory_space<smem>>
      memref.store %65, %arg8[%c0_32] : memref<1xf32, #tpu.memory_space<smem>>
    } else {
    }
    %c1_i32 = arith.constant 1 : i32
    %49 = arith.cmpi eq, %arg0, %c1_i32 : i32
    %c0_i32_22 = arith.constant 0 : i32
    %50 = arith.cmpi eq, %arg1, %c0_i32_22 : i32
    %51 = arith.andi %49, %50 : i1
    %52 = arith.extui %51 : i1 to i32
    %c0_i32_23 = arith.constant 0 : i32
    %53 = arith.cmpi ne, %52, %c0_i32_23 : i32
    scf.if %53 {
      %c0_24 = arith.constant 0 : index
      %54 = memref.load %arg8[%c0_24] : memref<1xf32, #tpu.memory_space<smem>>
      %c0_25 = arith.constant 0 : index
      %c0_26 = arith.constant 0 : index
      %55 = vector.load %arg7[%c0_25, %c0_26] : memref<8x1xf32, #tpu.memory_space<vmem>>, vector<8x1xf32>
      %56 = vector.shape_cast %55 : vector<8x1xf32> to vector<1x8x1xf32>
      %cst_27 = arith.constant dense<0.000000e+00> : vector<1xf32>
      %57 = vector.multi_reduction <add>, %56, %cst_27 [1, 2] : vector<1x8x1xf32> to vector<1xf32>
      %58 = vector.shape_cast %57 : vector<1xf32> to vector<1x1x1xf32>
      %59 = vector.extract %58[0, 0, 0] : f32 from vector<1x1x1xf32>
      %cst_28 = arith.constant 8.000000e+00 : f32
      %60 = arith.divf %59, %cst_28 : f32
      %61 = arith.mulf %60, %54 : f32
      %62 = arith.mulf %61, %54 : f32
      %c0_29 = arith.constant 0 : index
      %63 = memref.load %arg5[%c0_29] : memref<1xf32, #tpu.memory_space<smem>>
      memref.store %62, %arg5[%c0_29] : memref<1xf32, #tpu.memory_space<smem>>
      %c0_30 = arith.constant 0 : index
      %64 = memref.load %arg6[%c0_30] : memref<1xf32, #tpu.memory_space<smem>>
      memref.store %54, %arg6[%c0_30] : memref<1xf32, #tpu.memory_space<smem>>
    } else {
    }
    return
  }
  func.func @transform_0(%arg0: i32, %arg1: i32) -> i32 {
    %c0_i32 = arith.constant 0 : i32
    %c0_i32_0 = arith.constant 0 : i32
    return %c0_i32 : i32
  }
  func.func @transform_1(%arg0: i32, %arg1: i32) -> (i32, i32) {
    %c0_i32 = arith.constant 0 : i32
    %c0_i32_0 = arith.constant 0 : i32
    return %arg1, %c0_i32 : i32, i32
  }
  func.func @transform_2(%arg0: i32, %arg1: i32) -> (i32, i32) {
    %c0_i32 = arith.constant 0 : i32
    %c0_i32_0 = arith.constant 0 : i32
    return %arg1, %c0_i32 : i32, i32
  }
  func.func @transform_3(%arg0: i32, %arg1: i32) -> i32 {
    %c0_i32 = arith.constant 0 : i32
    %c0_i32_0 = arith.constant 0 : i32
    return %c0_i32 : i32
  }
  func.func @transform_4(%arg0: i32, %arg1: i32) -> i32 {
    %c0_i32 = arith.constant 0 : i32
    %c0_i32_0 = arith.constant 0 : i32
    return %c0_i32 : i32
  }
}

</mosaic_0001>

<llo_original>
// kernel: tpu_custom_call.1
$region0: #{tpu_custom_call.1}
  #allocation0 [shape = 'u32[]', space=smem, size = 0x4, offset = 0x4, fixed_abs, tag = 'smem constant byte address 0x4 - core index']
  #allocation1 [shape = 'u32[144,128]{1,0:T(1,128)}', space=vmem, size = 0x12000, scoped, tag = 'internal scratch']
  #allocation2 [shape = 'f32[8,1]{1,0:T(8,128)}', space=vmem, size = 0x1000, scoped, tag = 'scratch operand']
  #allocation3 [shape = 'f32[1]{0:T(128)}', space=smem, size = 0x200, scoped, tag = 'scratch operand']
  #allocation4 [shape = 'f32[1]{0:T(128)S(6)}', space=smem, size = 0x200, scoped, tag = 'scoped memory for tpu_custom_call.1']
  %s0 = inlined_call_operand.<no memory space> [shape: f32[1], index: 0, kind: input, shape index: {}]
  %s1 = inlined_call_operand.hbm [shape: f32[8,128], index: 1, kind: input, shape index: {}]
  %s2 = inlined_call_operand.hbm [shape: f32[8,128], index: 2, kind: input, shape index: {}]
  %s3 = inlined_call_operand.hbm [shape: f32[1], index: 3, kind: output, shape index: {0}]
  %s4 = inlined_call_operand.hbm [shape: f32[1], index: 4, kind: output, shape index: {1}]
  %5 = xla_tuple %s3, %s4
  %s6 = sld [smem:[#allocation0]]
  $region77: #{tpu_custom_call.1} parent=0
    _
  %s8 = ssub.s32 1, %s6
  %s9 = scalar_select 0, %s8, %s6
  %10 = sst [smem:[#allocation4]] %s0
  $region1: #{tpu_custom_call.1} parent=0
    #allocation5 [shape = 'u8[4096]{0}', space=vmem, size = 0x1000, scoped, tag = 'input window, operand 1, single buffered']
    #allocation6 [shape = 's32[2]{0}', space=sflag, size = 0x8, scoped, tag = 'scoped memory for tpu_custom_call.1']
    #allocation7 [shape = 's32[2]{0}', space=sflag, size = 0x8, scoped, tag = 'scoped memory for tpu_custom_call.1']
    #allocation8 [shape = 'u8[4096]{0}', space=vmem, size = 0x1000, scoped, tag = 'input window, operand 2, single buffered']
    #allocation9 [shape = 's32[1]{0}', space=sflag, size = 0x4, scoped, tag = 'scoped memory for tpu_custom_call.1']
    #allocation10 [shape = 'u8[512]{0}', space=smem, size = 0x200, scoped, tag = 'output window, operand 0, single buffered']
    #allocation11 [shape = 'u8[512]{0}', space=smem, size = 0x200, scoped, tag = 'output window, operand 1, single buffered']
    #allocation12 [shape = 's32[1]{0}', space=sflag, size = 0x4, scoped, tag = 'scoped memory for tpu_custom_call.1']
    %11 = vsyncpa [#allocation6], 0
    %12 = vsyncpa [#allocation9], 0
    %13 = vsyncpa [#allocation7], 0
    %14 = vsyncpa [#allocation12], 0
    loop: start=0, step=1, limit=4
    $region2: #{tpu_custom_call.1} parent=1 // loop_pre_header
      _
    $region3: #{tpu_custom_call.1} parent=1 // loop_header
      %s16 = sphi 0, %s20
      %p17 = scmp.ge.s32.totalorder %s16, 4
      %s23 = sphi 0, %s35
      %s24 = sphi 0, %s31
      %s25 = sphi 0, %s23
      %s26 = sphi 0, %s24
      %s27 = sphi 0, %s25
      %s28 = sphi 0, %s26
      %s36 = sphi 0, %s36
      %s38 = sphi 0, %s36
      %s39 = sphi 0, %s38
      %s53 = sphi 0, %s39
      %s59 = sphi 0, %s61
      %s62 = sphi 0, %s59
      %s63 = sphi 0, %s62
      %s79 = sphi 0, %s63
      %s85 = sphi 0, %s87
      %s88 = sphi 0, %s85
      %s89 = sphi 0, %s88
      %s105 = sphi 0, %s89
      %s109 = sphi 0, %s109
      %s111 = sphi 0, %s109
      %s112 = sphi 0, %s111
      %s126 = sphi 0, %s112
      %s130 = sphi 0, %s130
      %s132 = sphi 0, %s130
      %s133 = sphi 0, %s132
      %s147 = sphi 0, %s133
    $region4: #{tpu_custom_call.1} parent=1 // loop_header_branch
      %19 = sbr.rel (%p17) target = $region8
    $region5: #{tpu_custom_call.1} parent=1 // loop_body
      %s21 = ssub.s32 %s16, 1
      %s22 = ssub.s32 %s16, 2
      %s29 = sadd.s32 1, %s24
      %p30 = scmp.ge.s32.totalorder %s29, 1
      %s31 = scalar_select %p30, 0, %s29
      %s32 = sadd.s32 1, %s23
      %s33 = scalar_select %p30, %s32, %s23
      %p34 = scmp.ge.s32.totalorder %s33, 2
      %s35 = scalar_select %p34, 0, %s33
      %s37 = sadd.s32 %s36, 1
      %p40 = scmp.eq.s32.totalorder %s16, 1
      %p41 = scmp.ne.s32.totalorder %s36, %s38
      %p42 = scmp.eq.s32.totalorder %s16, 0
      %p43 = por %p41, %p42
      %p44 = scmp.ne.s32.totalorder %s36, %s38
      %p45 = scmp.eq.s32.totalorder %s21, 1
      %p46 = por %p44, %p45
      %p47 = scmp.ne.s32.totalorder %s38, %s39
      %p48 = scmp.eq.s32.totalorder %s21, 0
      %p49 = por %p47, %p48
      %p50 = scmp.ne.s32.totalorder %s38, %s39
      %p51 = scmp.eq.s32.totalorder %s22, 1
      %p52 = por %p50, %p51
      %p54 = scmp.ne.s32.totalorder %s39, %s53
      %p55 = scmp.eq.s32.totalorder %s22, 0
      %p56 = por %p54, %p55
      %s57 = ssub.s32 %s24, %s31
      %p58 = scmp.eq.s32.totalorder %s57, 0
      %s60 = sadd.s32 %s59, 1
      %s61 = scalar_select %p58, %s59, %s60
      %p64 = pneg %p58
      %p65 = scmp.eq.s32.totalorder %s16, 1
      %p66 = por %p64, %p65
      %p67 = scmp.ne.s32.totalorder %s59, %s62
      %p68 = scmp.eq.s32.totalorder %s16, 0
      %p69 = por %p67, %p68
      %p70 = scmp.ne.s32.totalorder %s59, %s62
      %p71 = scmp.eq.s32.totalorder %s21, 1
      %p72 = por %p70, %p71
      %p73 = scmp.ne.s32.totalorder %s62, %s63
      %p74 = scmp.eq.s32.totalorder %s21, 0
      %p75 = por %p73, %p74
      %p76 = scmp.ne.s32.totalorder %s62, %s63
      %p77 = scmp.eq.s32.totalorder %s22, 1
      %p78 = por %p76, %p77
      %p80 = scmp.ne.s32.totalorder %s63, %s79
      %p81 = scmp.eq.s32.totalorder %s22, 0
      %p82 = por %p80, %p81
      %s83 = ssub.s32 %s24, %s31
      %p84 = scmp.eq.s32.totalorder %s83, 0
      %s86 = sadd.s32 %s85, 1
      %s87 = scalar_select %p84, %s85, %s86
      %p90 = pneg %p84
      %p91 = scmp.eq.s32.totalorder %s16, 1
      %p92 = por %p90, %p91
      %p93 = scmp.ne.s32.totalorder %s85, %s88
      %p94 = scmp.eq.s32.totalorder %s16, 0
      %p95 = por %p93, %p94
      %p96 = scmp.ne.s32.totalorder %s85, %s88
      %p97 = scmp.eq.s32.totalorder %s21, 1
      %p98 = por %p96, %p97
      %p99 = scmp.ne.s32.totalorder %s88, %s89
      %p100 = scmp.eq.s32.totalorder %s21, 0
      %p101 = por %p99, %p100
      %p102 = scmp.ne.s32.totalorder %s88, %s89
      %p103 = scmp.eq.s32.totalorder %s22, 1
      %p104 = por %p102, %p103
      %p106 = scmp.ne.s32.totalorder %s89, %s105
      %p107 = scmp.eq.s32.totalorder %s22, 0
      %p108 = por %p106, %p107
      %s110 = sadd.s32 %s109, 1
      %p113 = scmp.eq.s32.totalorder %s16, 1
      %p114 = scmp.ne.s32.totalorder %s109, %s111
      %p115 = scmp.eq.s32.totalorder %s16, 0
      %p116 = por %p114, %p115
      %p117 = scmp.ne.s32.totalorder %s109, %s111
      %p118 = scmp.eq.s32.totalorder %s21, 1
      %p119 = por %p117, %p118
      %p120 = scmp.ne.s32.totalorder %s111, %s112
      %p121 = scmp.eq.s32.totalorder %s21, 0
      %p122 = por %p120, %p121
      %p123 = scmp.ne.s32.totalorder %s111, %s112
      %p124 = scmp.eq.s32.totalorder %s22, 1
      %p125 = por %p123, %p124
      %p127 = scmp.ne.s32.totalorder %s112, %s126
      %p128 = scmp.eq.s32.totalorder %s22, 0
      %p129 = por %p127, %p128
      %s131 = sadd.s32 %s130, 1
      %p134 = scmp.eq.s32.totalorder %s16, 1
      %p135 = scmp.ne.s32.totalorder %s130, %s132
      %p136 = scmp.eq.s32.totalorder %s16, 0
      %p137 = por %p135, %p136
      %p138 = scmp.ne.s32.totalorder %s130, %s132
      %p139 = scmp.eq.s32.totalorder %s21, 1
      %p140 = por %p138, %p139
      %p141 = scmp.ne.s32.totalorder %s132, %s133
      %p142 = scmp.eq.s32.totalorder %s21, 0
      %p143 = por %p141, %p142
      %p144 = scmp.ne.s32.totalorder %s132, %s133
      %p145 = scmp.eq.s32.totalorder %s22, 1
      %p146 = por %p144, %p145
      %p148 = scmp.ne.s32.totalorder %s133, %s147
      %p149 = scmp.eq.s32.totalorder %s22, 0
      %p150 = por %p148, %p149
      %p151 = scmp.le.s32.totalorder 1, %s16
      %p152 = scmp.lt.s32.totalorder %s16, 3
      %p153 = pnand %p151, %p152
      %p154 = pneg %p153
      // Predicated region
      $region9: #{tpu_custom_call.1} parent=5 // pred_check
        _
      $region10: #{tpu_custom_call.1} parent=5 // pred_check_branch
        %156 = sbr.rel (%p153) target = $region12
      $region11: #{tpu_custom_call.1} parent=5 // pred_region
        %s157 = ssub.s32 %s16, 1
        // Predicated region
        $region13: #{tpu_custom_call.1} parent=11 // pred_check
          %p158 = pneg %p49
        $region14: #{tpu_custom_call.1} parent=11 // pred_check_branch
          %160 = sbr.rel (%p158) target = $region16
        $region15: #{tpu_custom_call.1} parent=11 // pred_region
          _
        $region16: #{tpu_custom_call.1} parent=11 // pred_fallthru
          _
        // Predicated region
        $region17: #{tpu_custom_call.1} parent=11 // pred_check
          %p161 = pneg %p75
        $region18: #{tpu_custom_call.1} parent=11 // pred_check_branch
          %163 = sbr.rel (%p161) target = $region20
        $region19: #{tpu_custom_call.1} parent=11 // pred_region
          %s165 = ssub.s32 128, 128
          %166 = vsyncadd [#allocation6], %s165
          %s167 = smul.addr %s26, 128
          %s168 = scalar_lea.hbm %s1, %s167
          %s170 = sshll.u32 [#allocation5], 4
          %s171 = int_to_ptr.vmem [resolvable:$true] %s170
          %173 = dma.hbm_to_vmem [thread:$0]  %s168, 128, %s171, [#allocation6]
        $region20: #{tpu_custom_call.1} parent=11 // pred_fallthru
          _
        // Predicated region
        $region21: #{tpu_custom_call.1} parent=11 // pred_check
          %p174 = pneg %p101
        $region22: #{tpu_custom_call.1} parent=11 // pred_check_branch
          %176 = sbr.rel (%p174) target = $region24
        $region23: #{tpu_custom_call.1} parent=11 // pred_region
          %s178 = ssub.s32 128, 128
          %179 = vsyncadd [#allocation9], %s178
          %s180 = smul.addr %s26, 128
          %s181 = scalar_lea.hbm %s2, %s180
          %s183 = sshll.u32 [#allocation8], 4
          %s184 = int_to_ptr.vmem [resolvable:$true] %s183
          %186 = dma.hbm_to_vmem [thread:$0]  %s181, 128, %s184, [#allocation9]
        $region24: #{tpu_custom_call.1} parent=11 // pred_fallthru
          _
      $region12: #{tpu_custom_call.1} parent=5 // pred_fallthru
        _
      %p187 = scmp.lt.s32.totalorder %s16, 2
      // Predicated region
      $region25: #{tpu_custom_call.1} parent=5 // pred_check
        %p188 = pneg %p187
      $region26: #{tpu_custom_call.1} parent=5 // pred_check_branch
        %190 = sbr.rel (%p188) target = $region28
      $region27: #{tpu_custom_call.1} parent=5 // pred_region
        _
      $region28: #{tpu_custom_call.1} parent=5 // pred_fallthru
        _
      %p191 = scmp.le.s32.totalorder 1, %s16
      %p192 = scmp.lt.s32.totalorder %s16, 3
      %p193 = pnand %p191, %p192
      %p194 = pneg %p193
      // Predicated region
      $region29: #{tpu_custom_call.1} parent=5 // pred_check
        _
      $region30: #{tpu_custom_call.1} parent=5 // pred_check_branch
        %196 = sbr.rel (%p193) target = $region32
      $region31: #{tpu_custom_call.1} parent=5 // pred_region
        %s197 = ssub.s32 %s16, 1
        // Predicated region
        $region33: #{tpu_custom_call.1} parent=31 // pred_check
          %p198 = pneg %p75
        $region34: #{tpu_custom_call.1} parent=31 // pred_check_branch
          %200 = sbr.rel (%p198) target = $region36
        $region35: #{tpu_custom_call.1} parent=31 // pred_region
          %201 = dma.done [#allocation6], 128
        $region36: #{tpu_custom_call.1} parent=31 // pred_fallthru
          _
        // Predicated region
        $region37: #{tpu_custom_call.1} parent=31 // pred_check
          %p202 = pneg %p101
        $region38: #{tpu_custom_call.1} parent=31 // pred_check_branch
          %204 = sbr.rel (%p202) target = $region40
        $region39: #{tpu_custom_call.1} parent=31 // pred_region
          %205 = dma.done [#allocation9], 128
        $region40: #{tpu_custom_call.1} parent=31 // pred_fallthru
          _
        %p206 = pneg %p49
        %p207 = pneg %p46
        %p208 = pneg %p75
        %p209 = pneg %p72
        %p210 = pneg %p101
        %p211 = pneg %p98
        %p212 = pneg %p122
        %p213 = pneg %p119
        %p214 = pneg %p143
        %p215 = pneg %p140
        %p216 = scmp.eq.s32.totalorder %s25, 0
        %p217 = scmp.eq.s32.totalorder %s26, 0
        %p218 = pnand %p216, %p217
        %p219 = pneg %p218
        // Predicated region
        $region41: #{tpu_custom_call.1} parent=31 // pred_check
          _
        $region42: #{tpu_custom_call.1} parent=31 // pred_check_branch
          %221 = sbr.rel (%p218) target = $region44
        $region43: #{tpu_custom_call.1} parent=31 // pred_region
          %s222 = sld [smem:[#allocation4]]
          %s223 = scalar_lea.smem [#allocation3], 0
          %224 = sst [smem:[%s223]] %s222
        $region44: #{tpu_custom_call.1} parent=31 // pred_fallthru
          _
        // Predicated region
        $region45: #{tpu_custom_call.1} parent=31 // pred_check
          %p225 = pneg %p217
        $region46: #{tpu_custom_call.1} parent=31 // pred_check_branch
          %227 = sbr.rel (%p225) target = $region48
        $region47: #{tpu_custom_call.1} parent=31 // pred_region
          %vm228 = vcmask 7168
          %229 = vst.msk [vmem:[#allocation2] sm:$0xff] %vm228, 0.0
        $region48: #{tpu_custom_call.1} parent=31 // pred_fallthru
          _
        %s230 = sld [smem:[#allocation3]]
        %v231 = vstv %s230
        %v232 = vrcp.pop %v231
        %s233 = vtos %v232
        %s234 = scalar_select %p216, 1.0, %s233
        %v235 = vld [vmem:[#allocation5] sm:$0xff]
        %v236 = vld [vmem:[#allocation8] sm:$0xff]
        %237 = vmax.xlane.f32.xlu0 %v235
        %v238 = vpop.xlane.xlu0 %237
        %v239 = vsub.f32 %v235, %v238
        %v240 = vstv %s234
        %v241 = vmul.f32 %v239, %v240
        %242 = vmax.xlane.f32.xlu0 %v236
        %v243 = vpop.xlane.xlu0 %242
        %v244 = vsub.f32 %v236, %v243
        %v245 = vmul.f32 %v244, %v240
        %v246 = vmul.f32 %v241, 1.442695
        %v247 = vpow.pop %v246
        %v248 = vmul.f32 %v245, 1.442695
        %v249 = vpow.pop %v248
        %250 = vadd.xlane.f32.xlu0 %v247
        %v251 = vpop.xlane.xlu0 %250
        %252 = vadd.xlane.f32.xlu0 %v249
        %v253 = vpop.xlane.xlu0 %252
        %v254 = vsub.f32 %v245, %v241
        %v255 = vmul.f32 %v249, %v254
        %256 = vadd.xlane.f32.xlu0 %v255
        %v257 = vpop.xlane.xlu0 %256
        %v258 = vld [vmem:[#allocation2] sm:$0xff]
        %v259 = vrcp.pop %v253
        %v260 = vmul.f32 %v257, %v259
        %v261 = vlog2.pop %v251
        %v262 = vmul.f32 %v261, 0.6931472
        %v263 = vlog2.pop %v253
        %v264 = vmul.f32 %v263, 0.6931472
        %v265 = vsub.f32 %v262, %v264
        %v266 = vadd.f32 %v260, %v265
        %v267 = vadd.f32 %v258, %v266
        %vm268 = vcmask 7168
        %269 = vst.msk [vmem:[#allocation2] sm:$0xff] %vm268, %v267
        // Predicated region
        $region49: #{tpu_custom_call.1} parent=31 // pred_check
          _
        $region50: #{tpu_custom_call.1} parent=31 // pred_check_branch
          %271 = sbr.rel (%p218) target = $region52
        $region51: #{tpu_custom_call.1} parent=31 // pred_region
          %v272 = vld [vmem:[#allocation2] sm:$0xff]
          %v273 = vsel %vm268, %v272, 0.0
          %274 = vadd.xlane.f32.xlu0 %v273
          %v275 = vpop.xlane.xlu0 %274
          %v276 = vrot.slane %v275, 4
          %v277 = vadd.f32 %v275, %v276
          %v278 = vrot.slane %v277, 2
          %v279 = vadd.f32 %v277, %v278
          %v280 = vrot.slane %v279, 1
          %v281 = vadd.f32 %v279, %v280
          %s282 = vtos %v281
          %v283 = vrcp.pop 8.0
          %s284 = vtos %v283
          %s285 = smul.f32 %s282, %s284
          %s286 = sld [smem:[#allocation3]]
          %s287 = sadd.f32 %s285, 1.0
          %s288 = smul.f32 %s286, %s287
          %s289 = smul.f32 %s286, 0.9
          %s290 = smul.f32 %s288, 0.1
          %s291 = sadd.f32 %s289, %s290
          %s292 = scalar_lea.smem [#allocation3], 0
          %293 = sst [smem:[%s292]] %s291
        $region52: #{tpu_custom_call.1} parent=31 // pred_fallthru
          _
        %p294 = scmp.eq.s32.totalorder %s25, 1
        %p295 = pnand %p294, %p217
        %p296 = pneg %p295
        // Predicated region
        $region53: #{tpu_custom_call.1} parent=31 // pred_check
          _
        $region54: #{tpu_custom_call.1} parent=31 // pred_check_branch
          %298 = sbr.rel (%p295) target = $region56
        $region55: #{tpu_custom_call.1} parent=31 // pred_region
          %s299 = sld [smem:[#allocation3]]
          %v300 = vld [vmem:[#allocation2] sm:$0xff]
          %v301 = vsel %vm268, %v300, 0.0
          %302 = vadd.xlane.f32.xlu0 %v301
          %v303 = vpop.xlane.xlu0 %302
          %v304 = vrot.slane %v303, 4
          %v305 = vadd.f32 %v303, %v304
          %v306 = vrot.slane %v305, 2
          %v307 = vadd.f32 %v305, %v306
          %v308 = vrot.slane %v307, 1
          %v309 = vadd.f32 %v307, %v308
          %s310 = vtos %v309
          %v311 = vrcp.pop 8.0
          %s312 = vtos %v311
          %s313 = smul.f32 %s310, %s312
          %s314 = smul.f32 %s313, %s299
          %s315 = smul.f32 %s314, %s299
          %s316 = scalar_lea.smem [#allocation10], 0
          %317 = sst [smem:[%s316]] %s315
          %s318 = scalar_lea.smem [#allocation11], 0
          %319 = sst [smem:[%s318]] %s299
        $region56: #{tpu_custom_call.1} parent=31 // pred_fallthru
          _
        // Predicated region
        $region57: #{tpu_custom_call.1} parent=31 // pred_check
          %p320 = pneg %p119
        $region58: #{tpu_custom_call.1} parent=31 // pred_check_branch
          %322 = sbr.rel (%p320) target = $region60
        $region59: #{tpu_custom_call.1} parent=31 // pred_region
          %s324 = ssub.s32 16, 16
          %325 = vsyncadd [#allocation7], %s324
          %328 = dma.smem_to_hbm [#allocation10], 16, %s3, [#allocation7]
        $region60: #{tpu_custom_call.1} parent=31 // pred_fallthru
          _
        // Predicated region
        $region61: #{tpu_custom_call.1} parent=31 // pred_check
          %p329 = pneg %p140
        $region62: #{tpu_custom_call.1} parent=31 // pred_check_branch
          %331 = sbr.rel (%p329) target = $region64
        $region63: #{tpu_custom_call.1} parent=31 // pred_region
          %s333 = ssub.s32 16, 16
          %334 = vsyncadd [#allocation12], %s333
          %337 = dma.smem_to_hbm [#allocation11], 16, %s4, [#allocation12]
        $region64: #{tpu_custom_call.1} parent=31 // pred_fallthru
          _
        // Predicated region
        $region65: #{tpu_custom_call.1} parent=31 // pred_check
          %p338 = pneg %p119
        $region66: #{tpu_custom_call.1} parent=31 // pred_check_branch
          %340 = sbr.rel (%p338) target = $region68
        $region67: #{tpu_custom_call.1} parent=31 // pred_region
          %341 = dma.done [#allocation7], 16
        $region68: #{tpu_custom_call.1} parent=31 // pred_fallthru
          _
        // Predicated region
        $region69: #{tpu_custom_call.1} parent=31 // pred_check
          %p342 = pneg %p140
        $region70: #{tpu_custom_call.1} parent=31 // pred_check_branch
          %344 = sbr.rel (%p342) target = $region72
        $region71: #{tpu_custom_call.1} parent=31 // pred_region
          %345 = dma.done [#allocation12], 16
        $region72: #{tpu_custom_call.1} parent=31 // pred_fallthru
          _
        %346 = sfence
      $region32: #{tpu_custom_call.1} parent=5 // pred_fallthru
        _
      %p347 = scmp.le.s32.totalorder 2, %s16
      // Predicated region
      $region73: #{tpu_custom_call.1} parent=5 // pred_check
        %p348 = pneg %p347
      $region74: #{tpu_custom_call.1} parent=5 // pred_check_branch
        %350 = sbr.rel (%p348) target = $region76
      $region75: #{tpu_custom_call.1} parent=5 // pred_region
        %s351 = ssub.s32 %s16, 2
      $region76: #{tpu_custom_call.1} parent=5 // pred_fallthru
        _
    $region6: #{tpu_custom_call.1} parent=1 // loop_footer
      %s20 = sadd.s32 1, %s16
    $region7: #{tpu_custom_call.1} parent=1 // loop_footer_branch
      %15 = sbr.rel target = $region3
    $region8: #{tpu_custom_call.1} parent=1 // loop_exit
      _
    %352 = vsyncpa [#allocation6], 1
    %s353 = scalar_lea.sflag [#allocation6], 1
    %354 = vsyncpa %s353, 1
    %355 = vsyncpa [#allocation9], 1
    %356 = vsyncpa [#allocation7], 1
    %s357 = scalar_lea.sflag [#allocation7], 1
    %358 = vsyncpa %s357, 1
    %359 = vsyncpa [#allocation12], 1

</llo_original>
